<compile_context>
chip_gen: v7x
topology: tpu7x:2x2x1
jax: 0.10.0
libtpu: 0.0.40
codegen_flags: <defaults>
</compile_context>

<pallas_src>
from typing import NamedTuple

import jax
import jax.numpy as jnp
from jax.experimental import pallas as pl
from jax.experimental.pallas import tpu as pltpu


def _round_up(n, m):
    return ((n + m - 1) // m) * m


class HighwayParams(NamedTuple):
    w: jax.Array   # (Dp, 2*Dp) packed/interleaved [gate_j | transform_j] blocks
    b: jax.Array   # (1, 2*Dp) f32, same interleaving (padded columns are zero)
    d: int         # original feature size D
    dp: int        # padded feature size (multiple of 128)
    tile_d: int    # output-column tile (multiple of 128, divides dp)
    n_col: int     # dp // tile_d


def _default_tile_d(dp, w_dtype):
    """Column tile for the packed weight slab.

    Keep the whole (Dp, 2*Dp) slab resident (single, single-buffered block)
    while it is <= ~16 MiB.  Beyond that, tile its output axis so each
    (Dp, 2*tile_d) block is <= ~8 MiB and the default 2-deep pipeline can
    overlap weight DMA behind the MXU (needed to fit v7x's 64 MiB VMEM/TC).
    """
    itemsize = jnp.dtype(w_dtype).itemsize
    slab_bytes = dp * 2 * dp * itemsize
    if slab_bytes <= (16 << 20):
        return dp
    target = 8 << 20
    td = max(128, (target // (2 * dp * itemsize)) // 128 * 128)
    while dp % td:
        td -= 128
    return td


def pack_highway_params(w1, b1, w2, b2, *, dtype=jnp.bfloat16, tile_d=None):
    """Pack Highway parameters ONCE (hoisted out of the per-call wrapper).

    w1, w2 are (D_in, D_out), i.e. the transpose of PyTorch's Linear.weight,
    so the kernel computes x @ W + b.  `dtype` is the MXU input dtype for the
    weights (bf16 is the native fast path on v5e/v6e/v7x); biases stay f32.
    """
    w1 = jnp.asarray(w1)
    w2 = jnp.asarray(w2)
    b1 = jnp.asarray(b1)
    b2 = jnp.asarray(b2)
    D = w1.shape[0]
    if w1.shape != (D, D) or w2.shape != (D, D) or b1.shape != (D,) or b2.shape != (D,):
        raise ValueError("expected (D, D) weights and (D,) biases")

    Dp = _round_up(max(D, 128), 128)
    if tile_d is None:
        tile_d = _default_tile_d(Dp, dtype)
    if Dp % tile_d or tile_d % 128:
        raise ValueError("tile_d must be a multiple of 128 that divides padded D")
    n_col = Dp // tile_d

    # NOTE: padded weight/bias columns MUST stay zero.  Then padded lanes give
    # t = sigmoid(0) = 0.5, relu(0) = 0, x_pad = 0 -> output 0, and the wrapper
    # slices them off.  Do not pack non-zero values into the padding.
    def pad_w(w):
        return jnp.zeros((Dp, Dp), jnp.float32).at[:D, :D].set(w.astype(jnp.float32))

    def pad_b(b):
        return jnp.zeros((Dp,), jnp.float32).at[:D].set(b.astype(jnp.float32))

    w1p, w2p = pad_w(w1), pad_w(w2)
    # Interleave per output-column window j: [gate_j (td) | transform_j (td)].
    w = jnp.stack([w1p.reshape(Dp, n_col, tile_d),
                   w2p.reshape(Dp, n_col, tile_d)], axis=2)
    w = w.reshape(Dp, 2 * Dp).astype(dtype)
    b = jnp.stack([pad_b(b1).reshape(n_col, tile_d),
                   pad_b(b2).reshape(n_col, tile_d)], axis=1)
    b = b.reshape(1, 2 * Dp)  # bias stays f32 (added post f32 accumulate)
    return HighwayParams(w=w, b=b, d=D, dp=Dp, tile_d=tile_d, n_col=n_col)


def _make_kernel(n_col, approx_sigmoid):
    def body(x_ref, xres_ref, w_ref, b_ref, o_ref):
        td = o_ref.shape[-1]
        x_mm = x_ref[...]
        if x_mm.dtype != w_ref.dtype:            # match the MXU input dtype
            x_mm = x_mm.astype(w_ref.dtype)
        # One fused matmul per (row-tile, col-tile): (tn, Dp) @ (Dp, 2*td).
        h = jnp.dot(x_mm, w_ref[...], preferred_element_type=jnp.float32)
        h = h + b_ref[...]
        g = h[:, :td]                            # gate pre-activation
        if approx_sigmoid:
            # EUP exp + approx reciprocal: keeps the divide off the VALU when
            # the kernel is MXU-bound (large D).
            t = pl.reciprocal(1.0 + jnp.exp(-g), approx=True)
        else:
            t = jax.nn.sigmoid(g)
        h2 = jnp.maximum(h[:, td:], 0.0)         # transform branch (relu)
        xr = xres_ref[...].astype(jnp.float32)   # residual kept in f32
        # t*h2 + (1-t)*x  ==  x + t*(h2 - x)
        o_ref[...] = (xr + t * (h2 - xr)).astype(o_ref.dtype)

    if n_col == 1:
        def kernel(x_ref, w_ref, b_ref, o_ref):
            body(x_ref, x_ref, w_ref, b_ref, o_ref)
    else:
        def kernel(x_ref, xcol_ref, w_ref, b_ref, o_ref):
            body(x_ref, xcol_ref, w_ref, b_ref, o_ref)
    return kernel


def _build_call(np_rows, tn, dp, td, n_col, out_dtype, single_buffer_resident,
                vmem_limit_bytes, approx_sigmoid):
    def resident_spec(shape, index_map):
        if single_buffer_resident:
            # Constant index_map -> double-buffering only doubles VMEM with
            # zero overlap benefit; keep a single buffer.
            return pl.BlockSpec(shape, index_map, pipeline_mode=pl.Buffered(1))
        return pl.BlockSpec(shape, index_map)

    # Full-row block for the matmul LHS; block index is constant across the
    # column axis, so it is fetched once per row tile.
    in_specs = [pl.BlockSpec((tn, dp), lambda i, j: (i, 0))]
    if n_col > 1:
        # Residual needs only the current output-column slice of x.
        in_specs.append(pl.BlockSpec((tn, td), lambda i, j: (i, j)))
    in_specs += [
        resident_spec((dp, 2 * td), lambda i, j: (0, j)),   # packed W1|W2 block
        resident_spec((1, 2 * td), lambda i, j: (0, j)),    # packed b1|b2 block
    ]
    return pl.pallas_call(
        _make_kernel(n_col, approx_sigmoid),
        out_shape=jax.ShapeDtypeStruct((np_rows, dp), out_dtype),
        grid_spec=pltpu.PrefetchScalarGridSpec(
            num_scalar_prefetch=0,
            grid=(np_rows // tn, n_col),
            in_specs=in_specs,
            out_specs=pl.BlockSpec((tn, td), lambda i, j: (i, j)),
        ),
        compiler_params=pltpu.CompilerParams(
            # Row axis "parallel": megacore / v7x dual-TensorCore sharding.
            dimension_semantics=("parallel", "arbitrary"),
            vmem_limit_bytes=vmem_limit_bytes,
        ),
    )


def _default_vmem_limit_bytes():
    cap = 128 << 20
    try:
        cap = int(getattr(pltpu.get_tpu_info(), "vmem_capacity_bytes", cap))
    except Exception:
        pass
    # 48 MiB on 128-MiB parts (v5e/v6e); ~38 MiB on v7x (64 MiB physical/TC).
    return min(48 << 20, (cap * 3) // 5)


def _default_row_tile(dp):
    if dp <= 512:
        return 1024   # mem-bound regime: big tiles reach ~85% of HBM roofline
    if dp <= 1024:
        return 512
    return 256


def highway(x, params, *, tn=None, vmem_limit_bytes=None):
    """Highway forward: y = sigmoid(x@W1+b1) * relu(x@W2+b2) + (1-sig) * x.

    `params` comes from pack_highway_params (packed once, reused every call).
    Accepts any (..., D)-shaped x in f32 or bf16; output has x's dtype.
    """
    *lead, D = x.shape
    if D != params.d:
        raise ValueError(f"feature dim {D} != packed feature dim {params.d}")
    dp, td, n_col = params.dp, params.tile_d, params.n_col

    x2 = x.reshape(-1, D)
    N = x2.shape[0]

    rows = _round_up(max(N, 8), 8)
    tn_eff = min(tn if tn is not None else _default_row_tile(dp), rows)
    # Keep >= 2 row steps when there is enough work so a v7x chip can spread
    # the "parallel" row axis over both of its TensorCores.
    if rows > 256 and tn_eff >= rows:
        tn_eff = _round_up((rows + 1) // 2, 8)
    np_rows = _round_up(N, tn_eff)

    # Pad only when needed, in x's NATIVE dtype (no wrapper f32 upcast).
    need_pad = (np_rows != N) or (dp != D)
    xp = x2 if not need_pad else jnp.pad(x2, ((0, np_rows - N), (0, dp - D)))

    vlim = (vmem_limit_bytes if vmem_limit_bytes is not None
            else _default_vmem_limit_bytes())
    approx_sig = dp >= 1024   # only worth it once the MXU is the binding unit
    args = (xp, xp, params.w, params.b) if n_col > 1 else (xp, params.w, params.b)

    def run(single_buffer_resident):
        call = _build_call(np_rows, tn_eff, dp, td, n_col, x.dtype,
                           single_buffer_resident, vlim, approx_sig)
        return call(*args)

    if n_col == 1:
        try:
            out = run(True)
        except Exception:
            # Fallback for jax versions without BlockSpec pipeline_mode /
            # Buffered(1); costs VMEM only, never correctness.
            out = run(False)
    else:
        out = run(False)      # block index varies with j -> keep 2-deep pipeline

    if need_pad:
        out = out[:N, :D]
    return out.reshape(*lead, D)


def highway_ref(x, w1, b1, w2, b2):
    xf = x.astype(jnp.float32)
    t = jax.nn.sigmoid(xf @ w1 + b1)
    return t * jnp.maximum(xf @ w2 + b2, 0.0) + (1.0 - t) * xf


if __name__ == "__main__":
    key = jax.random.PRNGKey(0)

    def make_case(Dk, Nk, k):
        kx, k1, kb1, k2, kb2 = jax.random.split(k, 5)
        x = jax.random.normal(kx, (Nk, Dk), dtype=jnp.float32)
        w1 = jax.random.normal(k1, (Dk, Dk), dtype=jnp.float32) * 0.1
        b1 = jax.random.normal(kb1, (Dk,), dtype=jnp.float32) * 0.1
        w2 = jax.random.normal(k2, (Dk, Dk), dtype=jnp.float32) * 0.1
        b2 = jax.random.normal(kb2, (Dk,), dtype=jnp.float32) * 0.1
        return x, w1, b1, w2, b2

    keys = jax.random.split(key, 3)

    # 1) Module-sized case (input_size=32, 16 tokens), f32 weights -> exact.
    x, w1, b1, w2, b2 = make_case(32, 16, keys[0])
    ref = highway_ref(x, w1, b1, w2, b2)
    p_f32 = pack_highway_params(w1, b1, w2, b2, dtype=jnp.float32)
    out = jax.block_until_ready(highway(x, p_f32))
    assert out.shape == (16, 32) and out.dtype == x.dtype
    assert jnp.allclose(out, ref, atol=1e-5, rtol=1e-5)

    # 2) Default bf16 weights (MXU-native fast path), f32 accumulate/elementwise.
    p_bf16 = pack_highway_params(w1, b1, w2, b2)
    out = jax.block_until_ready(highway(x, p_bf16))
    assert jnp.allclose(out, ref, atol=1e-1, rtol=1e-1)

    # 2b) bf16 activations: padded in native dtype, residual upcast in-kernel.
    out_bf = jax.block_until_ready(highway(x.astype(jnp.bfloat16), p_bf16))
    assert out_bf.dtype == jnp.bfloat16
    assert jnp.allclose(out_bf.astype(jnp.float32), ref, atol=2e-1, rtol=2e-1)

    # 3) Aligned shapes (D % 128 == 0, N % tn == 0): no wrapper pad / slice.
    x3, w1, b1, w2, b2 = make_case(128, 256, keys[1])
    ref3 = highway_ref(x3, w1, b1, w2, b2)
    out3 = jax.block_until_ready(highway(x3, pack_highway_params(w1, b1, w2, b2)))
    assert jnp.allclose(out3, ref3, atol=1e-1, rtol=1e-1)

    # 4) Column-tiled resident weights (large-D / v7x layout), forced small tile.
    x4, w1, b1, w2, b2 = make_case(256, 64, keys[2])
    ref4 = highway_ref(x4, w1, b1, w2, b2)
    p4 = pack_highway_params(w1, b1, w2, b2, tile_d=128)
    assert p4.n_col == 2
    out4 = jax.block_until_ready(highway(x4, p4))
    assert jnp.allclose(out4, ref4, atol=1e-1, rtol=1e-1)

    print("KERNEL_OK")
</pallas_src>

<mosaic_0001>
module attributes {stable_mosaic.version = 11 : i64} {
  func.func @kernel(%arg0: i32, %arg1: i32, %arg2: memref<16x128xf32, #tpu.memory_space<vmem>>, %arg3: memref<128x256xf32, #tpu.memory_space<vmem>>, %arg4: memref<1x256xf32, #tpu.memory_space<vmem>>, %arg5: memref<16x128xf32, #tpu.memory_space<vmem>>) attributes {dimension_semantics = [#tpu.dimension_semantics<parallel>, #tpu.dimension_semantics<arbitrary>], iteration_bounds = array<i64: 1, 1>, scalar_prefetch = 0 : i64, scratch_operands = 0 : i64, tpu.core_type = #tpu.core_type<tc>, window_params = [{transform_indices = @transform_0, window_bounds = array<i64: 16, 128>}, {pipeline_mode = #tpu.pipeline_mode<synchronous>, transform_indices = @transform_1, window_bounds = array<i64: 128, 256>}, {pipeline_mode = #tpu.pipeline_mode<synchronous>, transform_indices = @transform_2, window_bounds = array<i64: 1, 256>}, {transform_indices = @transform_3, window_bounds = array<i64: 16, 128>}]} {
    %c0 = arith.constant 0 : index
    %c0_0 = arith.constant 0 : index
    %0 = vector.load %arg2[%c0, %c0_0] : memref<16x128xf32, #tpu.memory_space<vmem>>, vector<16x128xf32>
    %c0_1 = arith.constant 0 : index
    %c0_2 = arith.constant 0 : index
    %1 = vector.load %arg3[%c0_1, %c0_2] : memref<128x256xf32, #tpu.memory_space<vmem>>, vector<128x256xf32>
    %cst = arith.constant dense<0.000000e+00> : vector<16x256xf32>
    %2 = tpu.matmul %0, %1, %cst {dimension_numbers = #tpu.dot_dimension_numbers<[1], [0], [0], [1], [0, 0, 1, 1], [], []>} : vector<16x128xf32>, vector<128x256xf32>, vector<16x256xf32> -> vector<16x256xf32>
    %c0_3 = arith.constant 0 : index
    %c0_4 = arith.constant 0 : index
    %3 = vector.load %arg4[%c0_3, %c0_4] : memref<1x256xf32, #tpu.memory_space<vmem>>, vector<1x256xf32>
    %4 = vector.broadcast %3 : vector<1x256xf32> to vector<16x256xf32>
    %5 = arith.addf %2, %4 : vector<16x256xf32>
    %6 = vector.extract_strided_slice %5 {offsets = [0, 0], sizes = [16, 128], strides = [1, 1]} : vector<16x256xf32> to vector<16x128xf32>
    %7 = arith.negf %6 : vector<16x128xf32>
    %8 = math.exp %7 : vector<16x128xf32>
    %cst_5 = arith.constant 1.000000e+00 : f32
    %9 = vector.broadcast %cst_5 : f32 to vector<16x128xf32>
    %10 = arith.addf %9, %8 : vector<16x128xf32>
    %11 = arith.divf %9, %10 : vector<16x128xf32>
    %12 = vector.extract_strided_slice %5 {offsets = [0, 128], sizes = [16, 128], strides = [1, 1]} : vector<16x256xf32> to vector<16x128xf32>
    %cst_6 = arith.constant 0.000000e+00 : f32
    %13 = vector.broadcast %cst_6 : f32 to vector<16x128xf32>
    %14 = arith.maximumf %12, %13 : vector<16x128xf32>
    %c0_7 = arith.constant 0 : index
    %c0_8 = arith.constant 0 : index
    %15 = vector.load %arg2[%c0_7, %c0_8] : memref<16x128xf32, #tpu.memory_space<vmem>>, vector<16x128xf32>
    %16 = arith.subf %14, %15 : vector<16x128xf32>
    %17 = arith.mulf %11, %16 : vector<16x128xf32>
    %18 = arith.addf %15, %17 : vector<16x128xf32>
    %c0_9 = arith.constant 0 : index
    %c0_10 = arith.constant 0 : index
    %19 = vector.load %arg5[%c0_9, %c0_10] : memref<16x128xf32, #tpu.memory_space<vmem>>, vector<16x128xf32>
    tpu.vector_store %arg5[%c0_9, %c0_10], %18 {strides = array<i32>} : memref<16x128xf32, #tpu.memory_space<vmem>>, vector<16x128xf32>,
    return
  }
  func.func @transform_0(%arg0: i32, %arg1: i32) -> (i32, i32) {
    %c0_i32 = arith.constant 0 : i32
    %c0_i32_0 = arith.constant 0 : i32
    return %arg0, %c0_i32 : i32, i32
  }
  func.func @transform_1(%arg0: i32, %arg1: i32) -> (i32, i32) {
    %c0_i32 = arith.constant 0 : i32
    %c0_i32_0 = arith.constant 0 : i32
    return %c0_i32, %arg1 : i32, i32
  }
  func.func @transform_2(%arg0: i32, %arg1: i32) -> (i32, i32) {
    %c0_i32 = arith.constant 0 : i32
    %c0_i32_0 = arith.constant 0 : i32
    return %c0_i32, %arg1 : i32, i32
  }
  func.func @transform_3(%arg0: i32, %arg1: i32) -> (i32, i32) {
    %c0_i32 = arith.constant 0 : i32
    return %arg0, %arg1 : i32, i32
  }
}

module attributes {stable_mosaic.version = 11 : i64} {
  func.func @kernel(%arg0: i32, %arg1: i32, %arg2: memref<16x128xf32, #tpu.memory_space<vmem>>, %arg3: memref<128x256xf32, #tpu.memory_space<vmem>>, %arg4: memref<1x256xf32, #tpu.memory_space<vmem>>, %arg5: memref<16x128xf32, #tpu.memory_space<vmem>>) attributes {dimension_semantics = [#tpu.dimension_semantics<parallel>, #tpu.dimension_semantics<arbitrary>], iteration_bounds = array<i64: 1, 1>, scalar_prefetch = 0 : i64, scratch_operands = 0 : i64, tpu.core_type = #tpu.core_type<tc>, window_params = [{transform_indices = @transform_0, window_bounds = array<i64: 16, 128>}, {transform_indices = @transform_1, window_bounds = array<i64: 128, 256>}, {transform_indices = @transform_2, window_bounds = array<i64: 1, 256>}, {transform_indices = @transform_3, window_bounds = array<i64: 16, 128>}]} {
    %c0 = arith.constant 0 : index
    %c0_0 = arith.constant 0 : index
    %0 = vector.load %arg2[%c0, %c0_0] : memref<16x128xf32, #tpu.memory_space<vmem>>, vector<16x128xf32>
    %c0_1 = arith.constant 0 : index
    %c0_2 = arith.constant 0 : index
    %1 = vector.load %arg3[%c0_1, %c0_2] : memref<128x256xf32, #tpu.memory_space<vmem>>, vector<128x256xf32>
    %cst = arith.constant dense<0.000000e+00> : vector<16x256xf32>
    %2 = tpu.matmul %0, %1, %cst {dimension_numbers = #tpu.dot_dimension_numbers<[1], [0], [0], [1], [0, 0, 1, 1], [], []>} : vector<16x128xf32>, vector<128x256xf32>, vector<16x256xf32> -> vector<16x256xf32>
    %c0_3 = arith.constant 0 : index
    %c0_4 = arith.constant 0 : index
    %3 = vector.load %arg4[%c0_3, %c0_4] : memref<1x256xf32, #tpu.memory_space<vmem>>, vector<1x256xf32>
    %4 = vector.broadcast %3 : vector<1x256xf32> to vector<16x256xf32>
    %5 = arith.addf %2, %4 : vector<16x256xf32>
    %6 = vector.extract_strided_slice %5 {offsets = [0, 0], sizes = [16, 128], strides = [1, 1]} : vector<16x256xf32> to vector<16x128xf32>
    %7 = arith.negf %6 : vector<16x128xf32>
    %8 = math.exp %7 : vector<16x128xf32>
    %cst_5 = arith.constant 1.000000e+00 : f32
    %9 = vector.broadcast %cst_5 : f32 to vector<16x128xf32>
    %10 = arith.addf %9, %8 : vector<16x128xf32>
    %11 = arith.divf %9, %10 : vector<16x128xf32>
    %12 = vector.extract_strided_slice %5 {offsets = [0, 128], sizes = [16, 128], strides = [1, 1]} : vector<16x256xf32> to vector<16x128xf32>
    %cst_6 = arith.constant 0.000000e+00 : f32
    %13 = vector.broadcast %cst_6 : f32 to vector<16x128xf32>
    %14 = arith.maximumf %12, %13 : vector<16x128xf32>
    %c0_7 = arith.constant 0 : index
    %c0_8 = arith.constant 0 : index
    %15 = vector.load %arg2[%c0_7, %c0_8] : memref<16x128xf32, #tpu.memory_space<vmem>>, vector<16x128xf32>
    %16 = arith.subf %14, %15 : vector<16x128xf32>
    %17 = arith.mulf %11, %16 : vector<16x128xf32>
    %18 = arith.addf %15, %17 : vector<16x128xf32>
    %c0_9 = arith.constant 0 : index
    %c0_10 = arith.constant 0 : index
    %19 = vector.load %arg5[%c0_9, %c0_10] : memref<16x128xf32, #tpu.memory_space<vmem>>, vector<16x128xf32>
    tpu.vector_store %arg5[%c0_9, %c0_10], %18 {strides = array<i32>} : memref<16x128xf32, #tpu.memory_space<vmem>>, vector<16x128xf32>,
    return
  }
  func.func @transform_0(%arg0: i32, %arg1: i32) -> (i32, i32) {
    %c0_i32 = arith.constant 0 : i32
    %c0_i32_0 = arith.constant 0 : i32
    return %arg0, %c0_i32 : i32, i32
  }
  func.func @transform_1(%arg0: i32, %arg1: i32) -> (i32, i32) {
    %c0_i32 = arith.constant 0 : i32
    %c0_i32_0 = arith.constant 0 : i32
    return %c0_i32, %arg1 : i32, i32
  }
  func.func @transform_2(%arg0: i32, %arg1: i32) -> (i32, i32) {
    %c0_i32 = arith.constant 0 : i32
    %c0_i32_0 = arith.constant 0 : i32
    return %c0_i32, %arg1 : i32, i32
  }
  func.func @transform_3(%arg0: i32, %arg1: i32) -> (i32, i32) {
    %c0_i32 = arith.constant 0 : i32
    return %arg0, %arg1 : i32, i32
  }
}

</mosaic_0001>

<llo_original>
// kernel: tpu_custom_call.1
$region0: #{tpu_custom_call.1}
  #allocation0 [shape = 'u32[]', space=smem, size = 0x4, offset = 0x4, fixed_abs, tag = 'smem constant byte address 0x4 - core index']
  #allocation1 [shape = 'u32[144,128]{1,0:T(1,128)}', space=vmem, size = 0x12000, scoped, tag = 'internal scratch']
  %s0 = inlined_call_operand.hbm [shape: f32[16,128], index: 0, kind: input, shape index: {}]
  %s1 = inlined_call_operand.hbm [shape: f32[128,256], index: 1, kind: input, shape index: {}]
  %s2 = inlined_call_operand.vmem [shape: f32[1,256], index: 2, kind: input, shape index: {}]
  %s3 = inlined_call_operand.hbm [shape: f32[16,128], index: 3, kind: output, shape index: {}]
  %s4 = sld [smem:[#allocation0]]
  $region30: #{tpu_custom_call.1} parent=0
    _
  %s6 = ssub.s32 1, %s4
  %s7 = scalar_select 0, %s6, %s4
  $region1: #{tpu_custom_call.1} parent=0
    #allocation2 [shape = 'u8[8192]{0}', space=vmem, size = 0x2000, scoped, tag = 'input window, operand 0, single buffered']
    #allocation3 [shape = 's32[1]{0}', space=sflag, size = 0x4, scoped, tag = 'scoped memory for tpu_custom_call.1']
    #allocation4 [shape = 's32[1]{0}', space=sflag, size = 0x4, scoped, tag = 'scoped memory for tpu_custom_call.1']
    #allocation5 [shape = 'u8[131072]{0}', space=vmem, size = 0x20000, scoped, tag = 'input window, operand 1, single buffered']
    #allocation6 [shape = 's32[1]{0}', space=sflag, size = 0x4, scoped, tag = 'scoped memory for tpu_custom_call.1']
    #allocation7 [shape = 'u8[8192]{0}', space=vmem, size = 0x2000, scoped, tag = 'output window, operand 0, single buffered']
    %8 = vsyncpa [#allocation3], 0
    %9 = vsyncpa [#allocation6], 0
    %10 = vsyncpa [#allocation4], 0
    // Predicated region
    $region2: #{tpu_custom_call.1} parent=1 // pred_check
      _
    $region3: #{tpu_custom_call.1} parent=1 // pred_check_branch
      %12 = sbr.rel (0) target = $region5
    $region4: #{tpu_custom_call.1} parent=1 // pred_region
      %s14 = ssub.s32 256, 256
      %15 = vsyncadd [#allocation3], %s14
      %s16 = sshll.u32 [#allocation2], 4
      %s17 = int_to_ptr.vmem [resolvable:$true] %s16
      %22 = dma.hbm_to_vmem [thread:$0]  %s0, 256, %s17, [#allocation3], 128, 128, 8
    $region5: #{tpu_custom_call.1} parent=1 // pred_fallthru
      _
    // Predicated region
    $region6: #{tpu_custom_call.1} parent=1 // pred_check
      _
    $region7: #{tpu_custom_call.1} parent=1 // pred_check_branch
      %24 = sbr.rel (0) target = $region9
    $region8: #{tpu_custom_call.1} parent=1 // pred_region
      %s26 = ssub.s32 4096, 4096
      %27 = vsyncadd [#allocation6], %s26
      %s28 = sshll.u32 [#allocation5], 4
      %s29 = int_to_ptr.vmem [resolvable:$true] %s28
      %34 = dma.hbm_to_vmem [thread:$0]  %s1, 4096, %s29, [#allocation6], 256, 256, 16
    $region9: #{tpu_custom_call.1} parent=1 // pred_fallthru
      _
    // Predicated region
    $region10: #{tpu_custom_call.1} parent=1 // pred_check
      _
    $region11: #{tpu_custom_call.1} parent=1 // pred_check_branch
      %36 = sbr.rel (0) target = $region13
    $region12: #{tpu_custom_call.1} parent=1 // pred_region
      _
    $region13: #{tpu_custom_call.1} parent=1 // pred_fallthru
      _
    // Predicated region
    $region14: #{tpu_custom_call.1} parent=1 // pred_check
      _
    $region15: #{tpu_custom_call.1} parent=1 // pred_check_branch
      %38 = sbr.rel (0) target = $region17
    $region16: #{tpu_custom_call.1} parent=1 // pred_region
      %39 = dma.done [#allocation3], 256
    $region17: #{tpu_custom_call.1} parent=1 // pred_fallthru
      _
    // Predicated region
    $region18: #{tpu_custom_call.1} parent=1 // pred_check
      _
    $region19: #{tpu_custom_call.1} parent=1 // pred_check_branch
      %41 = sbr.rel (0) target = $region21
    $region20: #{tpu_custom_call.1} parent=1 // pred_region
      %42 = dma.done [#allocation6], 4096
    $region21: #{tpu_custom_call.1} parent=1 // pred_fallthru
      _
    %v43 = vld [vmem:[#allocation2] sm:$0xff]
    %v44 = vld [vmem:[#allocation2 + $0x8] sm:$0xff]
    %v45 = vld [vmem:[#allocation5] sm:$0xff]
    %v46 = vld [vmem:[#allocation5 + $0x8] sm:$0xff]
    %v47 = vld [vmem:[#allocation5 + $0x10] sm:$0xff]
    %v48 = vld [vmem:[#allocation5 + $0x18] sm:$0xff]
    %v49 = vld [vmem:[#allocation5 + $0x20] sm:$0xff]
    %v50 = vld [vmem:[#allocation5 + $0x28] sm:$0xff]
    %v51 = vld [vmem:[#allocation5 + $0x30] sm:$0xff]
    %v52 = vld [vmem:[#allocation5 + $0x38] sm:$0xff]
    %v53 = vld [vmem:[#allocation5 + $0x40] sm:$0xff]
    %v54 = vld [vmem:[#allocation5 + $0x48] sm:$0xff]
    %v55 = vld [vmem:[#allocation5 + $0x50] sm:$0xff]
    %v56 = vld [vmem:[#allocation5 + $0x58] sm:$0xff]
    %v57 = vld [vmem:[#allocation5 + $0x60] sm:$0xff]
    %v58 = vld [vmem:[#allocation5 + $0x68] sm:$0xff]
    %v59 = vld [vmem:[#allocation5 + $0x70] sm:$0xff]
    %v60 = vld [vmem:[#allocation5 + $0x78] sm:$0xff]
    %v61 = vld [vmem:[#allocation5 + $0x80] sm:$0xff]
    %v62 = vld [vmem:[#allocation5 + $0x88] sm:$0xff]
    %v63 = vld [vmem:[#allocation5 + $0x90] sm:$0xff]
    %v64 = vld [vmem:[#allocation5 + $0x98] sm:$0xff]
    %v65 = vld [vmem:[#allocation5 + $0xa0] sm:$0xff]
    %v66 = vld [vmem:[#allocation5 + $0xa8] sm:$0xff]
    %v67 = vld [vmem:[#allocation5 + $0xb0] sm:$0xff]
    %v68 = vld [vmem:[#allocation5 + $0xb8] sm:$0xff]
    %v69 = vld [vmem:[#allocation5 + $0xc0] sm:$0xff]
    %v70 = vld [vmem:[#allocation5 + $0xc8] sm:$0xff]
    %v71 = vld [vmem:[#allocation5 + $0xd0] sm:$0xff]
    %v72 = vld [vmem:[#allocation5 + $0xd8] sm:$0xff]
    %v73 = vld [vmem:[#allocation5 + $0xe0] sm:$0xff]
    %v74 = vld [vmem:[#allocation5 + $0xe8] sm:$0xff]
    %v75 = vld [vmem:[#allocation5 + $0xf0] sm:$0xff]
    %v76 = vld [vmem:[#allocation5 + $0xf8] sm:$0xff]
    %v77 = vld [vmem:[%s2] sm:$0x3]
    %v79 = vlaneseq
    %v80 = vshrl.u32 %v79, 7
    %v81 = vsub.s32 0, %v80
    %v82 = vrot.slane %v77, %v81
    %v83 = vlaneseq
    %v84 = vshrl.u32 %v83, 7
    %v85 = vsub.s32 1, %v84
    %v86 = vrot.slane %v77, %v85
    %89 = vmatprep.subr.mxu0 %v46
    %90 = vmatpush1.msra.mxu0 %v45
    %91 = vmatprep.subr.mxu0 %v48
    %92 = vmatpush1.msra.mxu0 %v47
    %93 = vmatprep.subr.mxu0 %v50
    %94 = vmatpush1.msra.mxu0 %v49
    %95 = vmatprep.subr.mxu0 %v52
    %96 = vmatpush1.msra.mxu0 %v51
    %97 = vmatprep.subr.mxu0 %v54
    %98 = vmatpush1.msra.mxu0 %v53
    %99 = vmatprep.subr.mxu0 %v56
    %100 = vmatpush1.msra.mxu0 %v55
    %101 = vmatprep.subr.mxu0 %v58
    %102 = vmatpush1.msra.mxu0 %v57
    %103 = vmatprep.subr.mxu0 %v60
    %104 = vmatpush1.msra.mxu0 %v59
    %105 = vmatprep.subr.mxu0 %v62
    %106 = vmatpush1.msra.mxu0 %v61
    %107 = vmatprep.subr.mxu0 %v64
    %108 = vmatpush1.msra.mxu0 %v63
    %109 = vmatprep.subr.mxu0 %v66
    %110 = vmatpush1.msra.mxu0 %v65
    %111 = vmatprep.subr.mxu0 %v68
    %112 = vmatpush1.msra.mxu0 %v67
    %113 = vmatprep.subr.mxu0 %v70
    %114 = vmatpush1.msra.mxu0 %v69
    %115 = vmatprep.subr.mxu0 %v72
    %116 = vmatpush1.msra.mxu0 %v71
    %117 = vmatprep.subr.mxu0 %v74
    %118 = vmatpush1.msra.mxu0 %v73
    %119 = vmatprep.subr.mxu0 %v76
    %120 = vmatpush1.msra.mxu0 %v75
    %121 = vmatprep.subr.mxu0 0.0
    %122 = vmatpush1.msra.mxu0 0.0
    %123 = vmatprep.subr.mxu0 0.0
    %124 = vmatpush1.msra.mxu0 0.0
    %125 = vmatprep.subr.mxu0 0.0
    %126 = vmatpush1.msra.mxu0 0.0
    %127 = vmatprep.subr.mxu0 0.0
    %128 = vmatpush1.msra.mxu0 0.0
    %129 = vmatprep.subr.mxu0 0.0
    %130 = vmatpush1.msra.mxu0 0.0
    %131 = vmatprep.subr.mxu0 0.0
    %132 = vmatpush1.msra.mxu0 0.0
    %133 = vmatprep.subr.mxu0 0.0
    %134 = vmatpush1.msra.mxu0 0.0
    %135 = vmatprep.subr.mxu0 0.0
    %136 = vmatpush1.msra.mxu0 0.0
    %137 = vmatprep.subr.mxu0 0.0
    %138 = vmatpush1.msra.mxu0 0.0
    %139 = vmatprep.subr.mxu0 0.0
    %140 = vmatpush1.msra.mxu0 0.0
    %141 = vmatprep.subr.mxu0 0.0
    %142 = vmatpush1.msra.mxu0 0.0
    %143 = vmatprep.subr.mxu0 0.0
    %144 = vmatpush1.msra.mxu0 0.0
    %145 = vmatprep.subr.mxu0 0.0
    %146 = vmatpush1.msra.mxu0 0.0
    %147 = vmatprep.subr.mxu0 0.0
    %148 = vmatpush1.msra.mxu0 0.0
    %149 = vmatprep.subr.mxu0 0.0
    %150 = vmatpush1.msra.mxu0 0.0
    %151 = vmatprep.subr.mxu0 0.0
    %152 = vmatpush1.msra.mxu0 0.0
    %153 = vmatprep.mubr.f32.mxu0 0.0
    %154 = vmatmul.mubr.f32.gmra.mrb[0].mxu0 %v43
    %v155 = vpop.f32.mrb[0].mxu0
    %v156 = vadd.f32 %v82, %v155
    %v157 = vpop.f32.mrb[0].mxu0
    %v158 = vadd.f32 %v86, %v157
    %159 = vmatprep.mubr.f32.mxu0 0.0
    %160 = vmatmul.mubr.f32.gmra.mrb[0].mxu0 %v44
    %v161 = vpop.f32.mrb[0].mxu0
    %v162 = vadd.f32 %v82, %v161
    %v163 = vpop.f32.mrb[0].mxu0
    %v164 = vadd.f32 %v86, %v163
    %165 = vdwg.mxu0
    %v166 = vxor.u32 %v156, 2147483648
    %v167 = vxor.u32 %v162, 2147483648
    %v168 = vmul.f32 %v166, 1.442695
    %v169 = vpow.pop %v168
    %v170 = vmul.f32 %v167, 1.442695
    %v171 = vpow.pop %v170
    %v172 = vadd.f32 %v169, 1.0
    %v173 = vadd.f32 %v171, 1.0
    %v174 = vrcp.pop %v172
    %v175 = vmul.f32 1.0, %v174
    %v176 = vrcp.pop %v173
    %v177 = vmul.f32 1.0, %v176
    %v178 = vmax.f32 %v158, 0.0
    %v179 = vmax.f32 %v164, 0.0
    %v180 = vsub.f32 %v178, %v43
    %v181 = vsub.f32 %v179, %v44
    %v182 = vmul.f32 %v175, %v180
    %v183 = vmul.f32 %v177, %v181
    %v184 = vadd.f32 %v43, %v182
    %v185 = vadd.f32 %v44, %v183
    %186 = vst [vmem:[#allocation7] sm:$0xff] %v184
    %187 = vst [vmem:[#allocation7 + $0x8] sm:$0xff] %v185
    // Predicated region
    $region22: #{tpu_custom_call.1} parent=1 // pred_check
      _
    $region23: #{tpu_custom_call.1} parent=1 // pred_check_branch
      %189 = sbr.rel (0) target = $region25
    $region24: #{tpu_custom_call.1} parent=1 // pred_region
      %s191 = ssub.s32 256, 256
      %192 = vsyncadd [#allocation4], %s191
      %s193 = sshll.u32 [#allocation7], 4
      %s194 = int_to_ptr.vmem [resolvable:$true] %s193
      %199 = dma.vmem_to_hbm [thread:$0]  %s194, 256, %s3, [#allocation4], 128, 128, 8
    $region25: #{tpu_custom_call.1} parent=1 // pred_fallthru
      _
    // Predicated region
    $region26: #{tpu_custom_call.1} parent=1 // pred_check
      _
    $region27: #{tpu_custom_call.1} parent=1 // pred_check_branch
      %201 = sbr.rel (0) target = $region29
    $region28: #{tpu_custom_call.1} parent=1 // pred_region
      %202 = dma.done [#allocation4], 256
    $region29: #{tpu_custom_call.1} parent=1 // pred_fallthru
      _
    %203 = vsyncpa [#allocation3], 1
    %204 = vsyncpa [#allocation6], 1
    %205 = vsyncpa [#allocation4], 1

// kernel: tpu_custom_call.1
$region0: #{tpu_custom_call.1}
  #allocation0 [shape = 'u32[]', space=smem, size = 0x4, offset = 0x4, fixed_abs, tag = 'smem constant byte address 0x4 - core index']
  #allocation1 [shape = 'u32[144,128]{1,0:T(1,128)}', space=vmem, size = 0x12000, scoped, tag = 'internal scratch']
  %s0 = inlined_call_operand.hbm [shape: f32[16,128], index: 0, kind: input, shape index: {}]
  %s1 = inlined_call_operand.hbm [shape: f32[128,256], index: 1, kind: input, shape index: {}]
  %s2 = inlined_call_operand.vmem [shape: f32[1,256], index: 2, kind: input, shape index: {}]
  %s3 = inlined_call_operand.hbm [shape: f32[16,128], index: 3, kind: output, shape index: {}]
  %s4 = sld [smem:[#allocation0]]
  $region30: #{tpu_custom_call.1} parent=0
    _
  %s6 = ssub.s32 1, %s4
  %s7 = scalar_select 0, %s6, %s4
  $region1: #{tpu_custom_call.1} parent=0
    #allocation2 [shape = 'u8[8192]{0}', space=vmem, size = 0x2000, scoped, tag = 'input window, operand 0, single buffered']
    #allocation3 [shape = 's32[1]{0}', space=sflag, size = 0x4, scoped, tag = 'scoped memory for tpu_custom_call.1']
    #allocation4 [shape = 's32[1]{0}', space=sflag, size = 0x4, scoped, tag = 'scoped memory for tpu_custom_call.1']
    #allocation5 [shape = 'u8[131072]{0}', space=vmem, size = 0x20000, scoped, tag = 'input window, operand 1, single buffered']
    #allocation6 [shape = 's32[1]{0}', space=sflag, size = 0x4, scoped, tag = 'scoped memory for tpu_custom_call.1']
    #allocation7 [shape = 'u8[8192]{0}', space=vmem, size = 0x2000, scoped, tag = 'output window, operand 0, single buffered']
    %8 = vsyncpa [#allocation3], 0
    %9 = vsyncpa [#allocation6], 0
    %10 = vsyncpa [#allocation4], 0
    // Predicated region
    $region2: #{tpu_custom_call.1} parent=1 // pred_check
      _
    $region3: #{tpu_custom_call.1} parent=1 // pred_check_branch
      %12 = sbr.rel (0) target = $region5
    $region4: #{tpu_custom_call.1} parent=1 // pred_region
      %s14 = ssub.s32 256, 256
      %15 = vsyncadd [#allocation3], %s14
      %s16 = sshll.u32 [#allocation2], 4
      %s17 = int_to_ptr.vmem [resolvable:$true] %s16
      %22 = dma.hbm_to_vmem [thread:$0]  %s0, 256, %s17, [#allocation3], 128, 128, 8
    $region5: #{tpu_custom_call.1} parent=1 // pred_fallthru
      _
    // Predicated region
    $region6: #{tpu_custom_call.1} parent=1 // pred_check
      _
    $region7: #{tpu_custom_call.1} parent=1 // pred_check_branch
      %24 = sbr.rel (0) target = $region9
    $region8: #{tpu_custom_call.1} parent=1 // pred_region
      %s26 = ssub.s32 4096, 4096
      %27 = vsyncadd [#allocation6], %s26
      %s28 = sshll.u32 [#allocation5], 4
      %s29 = int_to_ptr.vmem [resolvable:$true] %s28
      %34 = dma.hbm_to_vmem [thread:$0]  %s1, 4096, %s29, [#allocation6], 256, 256, 16
    $region9: #{tpu_custom_call.1} parent=1 // pred_fallthru
      _
    // Predicated region
    $region10: #{tpu_custom_call.1} parent=1 // pred_check
      _
    $region11: #{tpu_custom_call.1} parent=1 // pred_check_branch
      %36 = sbr.rel (0) target = $region13
    $region12: #{tpu_custom_call.1} parent=1 // pred_region
      _
    $region13: #{tpu_custom_call.1} parent=1 // pred_fallthru
      _
    // Predicated region
    $region14: #{tpu_custom_call.1} parent=1 // pred_check
      _
    $region15: #{tpu_custom_call.1} parent=1 // pred_check_branch
      %38 = sbr.rel (0) target = $region17
    $region16: #{tpu_custom_call.1} parent=1 // pred_region
      %39 = dma.done [#allocation3], 256
    $region17: #{tpu_custom_call.1} parent=1 // pred_fallthru
      _
    // Predicated region
    $region18: #{tpu_custom_call.1} parent=1 // pred_check
      _
    $region19: #{tpu_custom_call.1} parent=1 // pred_check_branch
      %41 = sbr.rel (0) target = $region21
    $region20: #{tpu_custom_call.1} parent=1 // pred_region
      %42 = dma.done [#allocation6], 4096
    $region21: #{tpu_custom_call.1} parent=1 // pred_fallthru
      _
    %v43 = vld [vmem:[#allocation2] sm:$0xff]
    %v44 = vld [vmem:[#allocation2 + $0x8] sm:$0xff]
    %v45 = vld [vmem:[#allocation5] sm:$0xff]
    %v46 = vld [vmem:[#allocation5 + $0x8] sm:$0xff]
    %v47 = vld [vmem:[#allocation5 + $0x10] sm:$0xff]
    %v48 = vld [vmem:[#allocation5 + $0x18] sm:$0xff]
    %v49 = vld [vmem:[#allocation5 + $0x20] sm:$0xff]
    %v50 = vld [vmem:[#allocation5 + $0x28] sm:$0xff]
    %v51 = vld [vmem:[#allocation5 + $0x30] sm:$0xff]
    %v52 = vld [vmem:[#allocation5 + $0x38] sm:$0xff]
    %v53 = vld [vmem:[#allocation5 + $0x40] sm:$0xff]
    %v54 = vld [vmem:[#allocation5 + $0x48] sm:$0xff]
    %v55 = vld [vmem:[#allocation5 + $0x50] sm:$0xff]
    %v56 = vld [vmem:[#allocation5 + $0x58] sm:$0xff]
    %v57 = vld [vmem:[#allocation5 + $0x60] sm:$0xff]
    %v58 = vld [vmem:[#allocation5 + $0x68] sm:$0xff]
    %v59 = vld [vmem:[#allocation5 + $0x70] sm:$0xff]
    %v60 = vld [vmem:[#allocation5 + $0x78] sm:$0xff]
    %v61 = vld [vmem:[#allocation5 + $0x80] sm:$0xff]
    %v62 = vld [vmem:[#allocation5 + $0x88] sm:$0xff]
    %v63 = vld [vmem:[#allocation5 + $0x90] sm:$0xff]
    %v64 = vld [vmem:[#allocation5 + $0x98] sm:$0xff]
    %v65 = vld [vmem:[#allocation5 + $0xa0] sm:$0xff]
    %v66 = vld [vmem:[#allocation5 + $0xa8] sm:$0xff]
    %v67 = vld [vmem:[#allocation5 + $0xb0] sm:$0xff]
    %v68 = vld [vmem:[#allocation5 + $0xb8] sm:$0xff]
    %v69 = vld [vmem:[#allocation5 + $0xc0] sm:$0xff]
    %v70 = vld [vmem:[#allocation5 + $0xc8] sm:$0xff]
    %v71 = vld [vmem:[#allocation5 + $0xd0] sm:$0xff]
    %v72 = vld [vmem:[#allocation5 + $0xd8] sm:$0xff]
    %v73 = vld [vmem:[#allocation5 + $0xe0] sm:$0xff]
    %v74 = vld [vmem:[#allocation5 + $0xe8] sm:$0xff]
    %v75 = vld [vmem:[#allocation5 + $0xf0] sm:$0xff]
    %v76 = vld [vmem:[#allocation5 + $0xf8] sm:$0xff]
    %v77 = vld [vmem:[%s2] sm:$0x3]
    %v79 = vlaneseq
    %v80 = vshrl.u32 %v79, 7
    %v81 = vsub.s32 0, %v80
    %v82 = vrot.slane %v77, %v81
    %v83 = vlaneseq
    %v84 = vshrl.u32 %v83, 7
    %v85 = vsub.s32 1, %v84
    %v86 = vrot.slane %v77, %v85
    %89 = vmatprep.subr.mxu0 %v46
    %90 = vmatpush1.msra.mxu0 %v45
    %91 = vmatprep.subr.mxu0 %v48
    %92 = vmatpush1.msra.mxu0 %v47
    %93 = vmatprep.subr.mxu0 %v50
    %94 = vmatpush1.msra.mxu0 %v49
    %95 = vmatprep.subr.mxu0 %v52
    %96 = vmatpush1.msra.mxu0 %v51
    %97 = vmatprep.subr.mxu0 %v54
    %98 = vmatpush1.msra.mxu0 %v53
    %99 = vmatprep.subr.mxu0 %v56
    %100 = vmatpush1.msra.mxu0 %v55
    %101 = vmatprep.subr.mxu0 %v58
    %102 = vmatpush1.msra.mxu0 %v57
    %103 = vmatprep.subr.mxu0 %v60
    %104 = vmatpush1.msra.mxu0 %v59
    %105 = vmatprep.subr.mxu0 %v62
    %106 = vmatpush1.msra.mxu0 %v61
    %107 = vmatprep.subr.mxu0 %v64
    %108 = vmatpush1.msra.mxu0 %v63
    %109 = vmatprep.subr.mxu0 %v66
    %110 = vmatpush1.msra.mxu0 %v65
    %111 = vmatprep.subr.mxu0 %v68
    %112 = vmatpush1.msra.mxu0 %v67
    %113 = vmatprep.subr.mxu0 %v70
    %114 = vmatpush1.msra.mxu0 %v69
    %115 = vmatprep.subr.mxu0 %v72
    %116 = vmatpush1.msra.mxu0 %v71
    %117 = vmatprep.subr.mxu0 %v74
    %118 = vmatpush1.msra.mxu0 %v73
    %119 = vmatprep.subr.mxu0 %v76
    %120 = vmatpush1.msra.mxu0 %v75
    %121 = vmatprep.subr.mxu0 0.0
    %122 = vmatpush1.msra.mxu0 0.0
    %123 = vmatprep.subr.mxu0 0.0
    %124 = vmatpush1.msra.mxu0 0.0
    %125 = vmatprep.subr.mxu0 0.0
    %126 = vmatpush1.msra.mxu0 0.0
    %127 = vmatprep.subr.mxu0 0.0
    %128 = vmatpush1.msra.mxu0 0.0
    %129 = vmatprep.subr.mxu0 0.0
    %130 = vmatpush1.msra.mxu0 0.0
    %131 = vmatprep.subr.mxu0 0.0
    %132 = vmatpush1.msra.mxu0 0.0
    %133 = vmatprep.subr.mxu0 0.0
    %134 = vmatpush1.msra.mxu0 0.0
    %135 = vmatprep.subr.mxu0 0.0
    %136 = vmatpush1.msra.mxu0 0.0
    %137 = vmatprep.subr.mxu0 0.0
    %138 = vmatpush1.msra.mxu0 0.0
    %139 = vmatprep.subr.mxu0 0.0
    %140 = vmatpush1.msra.mxu0 0.0
    %141 = vmatprep.subr.mxu0 0.0
    %142 = vmatpush1.msra.mxu0 0.0
    %143 = vmatprep.subr.mxu0 0.0
    %144 = vmatpush1.msra.mxu0 0.0
    %145 = vmatprep.subr.mxu0 0.0
    %146 = vmatpush1.msra.mxu0 0.0
    %147 = vmatprep.subr.mxu0 0.0
    %148 = vmatpush1.msra.mxu0 0.0
    %149 = vmatprep.subr.mxu0 0.0
    %150 = vmatpush1.msra.mxu0 0.0
    %151 = vmatprep.subr.mxu0 0.0
    %152 = vmatpush1.msra.mxu0 0.0
    %153 = vmatprep.mubr.f32.mxu0 0.0
    %154 = vmatmul.mubr.f32.gmra.mrb[0].mxu0 %v43
    %v155 = vpop.f32.mrb[0].mxu0
    %v156 = vadd.f32 %v82, %v155
    %v157 = vpop.f32.mrb[0].mxu0
    %v158 = vadd.f32 %v86, %v157
    %159 = vmatprep.mubr.f32.mxu0 0.0
    %160 = vmatmul.mubr.f32.gmra.mrb[0].mxu0 %v44
    %v161 = vpop.f32.mrb[0].mxu0
    %v162 = vadd.f32 %v82, %v161
    %v163 = vpop.f32.mrb[0].mxu0
    %v164 = vadd.f32 %v86, %v163
    %165 = vdwg.mxu0
    %v166 = vxor.u32 %v156, 2147483648
    %v167 = vxor.u32 %v162, 2147483648
    %v168 = vmul.f32 %v166, 1.442695
    %v169 = vpow.pop %v168
    %v170 = vmul.f32 %v167, 1.442695
    %v171 = vpow.pop %v170
    %v172 = vadd.f32 %v169, 1.0
    %v173 = vadd.f32 %v171, 1.0
    %v174 = vrcp.pop %v172
    %v175 = vmul.f32 1.0, %v174
    %v176 = vrcp.pop %v173
    %v177 = vmul.f32 1.0, %v176
    %v178 = vmax.f32 %v158, 0.0
    %v179 = vmax.f32 %v164, 0.0
    %v180 = vsub.f32 %v178, %v43
    %v181 = vsub.f32 %v179, %v44
    %v182 = vmul.f32 %v175, %v180
    %v183 = vmul.f32 %v177, %v181
    %v184 = vadd.f32 %v43, %v182
    %v185 = vadd.f32 %v44, %v183
    %186 = vst [vmem:[#allocation7] sm:$0xff] %v184
    %187 = vst [vmem:[#allocation7 + $0x8] sm:$0xff] %v185
    // Predicated region
    $region22: #{tpu_custom_call.1} parent=1 // pred_check
      _
    $region23: #{tpu_custom_call.1} parent=1 // pred_check_branch
      %189 = sbr.rel (0) target = $region25
    $region24: #{tpu_custom_call.1} parent=1 // pred_region
      %s191 = ssub.s32 256, 256
      %192 = vsyncadd [#allocation4], %s191
      %s193 = sshll.u32 [#allocation7], 4
      %s194 = int_to_ptr.vmem [resolvable:$true] %s193
      %199 = dma.vmem_to_hbm [thread:$0]  %s194, 256, %s3, [#allocation4], 128, 128, 8
    $region25: #{tpu_custom_call.1} parent=1 // pred_fallthru
      _
    // Predicated region
    $region26: #{tpu_custom_call.1} parent=1 // pred_check
      _
    $region27: #{tpu_custom_call.1} parent=1 // pred_check_branch
      %201 = sbr.rel (0) target = $region29
    $region28: #{tpu_custom_call.1} parent=1 // pred_region
      %202 = dma.done [#allocation4], 256
    $region29: #{tpu_custom_call.1} parent=1 // pred_fallthru
      _
    %203 = vsyncpa [#allocation3], 1
    %204 = vsyncpa [#allocation6], 1
    %205 = vsyncpa [#allocation4], 1

</llo_original>
